<compile_context>
chip_gen: v7x
topology: tpu7x:2x2x1
jax: 0.10.0
libtpu: 0.0.40
codegen_flags: <defaults>
</compile_context>

<pallas_src>
import jax
import jax.numpy as jnp
from jax.experimental import pallas as pl
from jax.experimental.pallas import tpu as pltpu

LANES = 128        # vreg lane width (last dim of the slab)
SUBLANE_ALIGN = 16 # sublane alignment safe for f32 (8) and bf16 (16) packing
TILE_ROWS = 2048   # static steady-state tile: 2048*128*4B = 1 MiB per f32 buffer


def _round_up(a, b):
    return (a + b - 1) // b * b


def linear_kernel(wb_ref, x_ref, o_ref):
    # wb_ref: SMEM (2,) f32 scalar-prefetch array: [weight, bias]
    # x_ref / o_ref: (tile_rows, 128) VMEM tiles of the lane-dense slab.
    w = wb_ref[0]
    b = wb_ref[1]
    y = x_ref[...].astype(jnp.float32) * w + b
    o_ref[...] = y.astype(o_ref.dtype)


def simple_model_forward(x, weight, bias):
    """x: (B, 1); weight: (1, 1); bias: (1,) -> (B, 1)."""
    B, F_in = x.shape
    assert F_in == 1 and weight.shape == (1, 1) and bias.shape == (1,)
    dtype = x.dtype

    # ---- lane-dense (rows, 128) slab --------------------------------------
    rows = pl.cdiv(B, LANES)
    if rows >= TILE_ROWS:
        # Steady state: fixed 1 MiB tiles, Pallas masks the ragged last tile.
        tile_rows = TILE_ROWS
        rows_alloc = rows
    else:
        # Small batch: one sublane-aligned tile covering everything.
        tile_rows = _round_up(rows, SUBLANE_ALIGN)
        rows_alloc = tile_rows

    total = rows_alloc * LANES
    flat = x.reshape(-1)
    pad = total - B
    if pad:
        # Only hit when B % 128 != 0 or B is tiny; zero-cost (pure reshape)
        # for large lane-aligned batches.
        flat = jnp.pad(flat, (0, pad))
    slab = flat.reshape(rows_alloc, LANES)

    # weight + bias packed into one SMEM scalar-prefetch array (cheap sld reads,
    # no per-step tiny VMEM DMAs).
    wb = jnp.stack([weight.reshape(()), bias.reshape(())]).astype(jnp.float32)

    grid = (pl.cdiv(rows_alloc, tile_rows),)

    out_slab = pl.pallas_call(
        linear_kernel,
        out_shape=jax.ShapeDtypeStruct((rows_alloc, LANES), dtype),
        grid_spec=pltpu.PrefetchScalarGridSpec(
            num_scalar_prefetch=1,  # wb -> SMEM, passed first to kernel & index_maps
            grid=grid,
            in_specs=[
                pl.BlockSpec((tile_rows, LANES), lambda i, wb_ref: (i, 0)),
            ],
            out_specs=pl.BlockSpec((tile_rows, LANES), lambda i, wb_ref: (i, 0)),
        ),
        compiler_params=pltpu.CompilerParams(
            # Embarrassingly parallel over batch; shards across both TCs on v7x
            # whenever the grid has >= 2 steps.
            dimension_semantics=("parallel",),
        ),
    )(wb, slab)

    out = out_slab.reshape(-1)
    if pad:
        out = out[:B]
    return out.reshape(B, 1)


if __name__ == "__main__":
    key = jax.random.PRNGKey(0)
    kx, kw, kb = jax.random.split(key, 3)

    batch = 8
    # Input consistent with nn.Linear(1, 1): (batch, 1)
    x = jax.random.normal(kx, (batch, 1), dtype=jnp.float32)

    # Parameter init mimicking PyTorch's U(-1/sqrt(fan_in), 1/sqrt(fan_in)), fan_in = 1
    weight = jax.random.uniform(kw, (1, 1), dtype=jnp.float32, minval=-1.0, maxval=1.0)
    bias = jax.random.uniform(kb, (1,), dtype=jnp.float32, minval=-1.0, maxval=1.0)

    y = simple_model_forward(x, weight, bias)
    jax.block_until_ready(y)

    # Reference check in plain JAX
    y_ref = x @ weight.T + bias
    assert y.shape == y_ref.shape, "shape mismatch vs reference"
    assert jnp.allclose(y, y_ref, atol=1e-6), "mismatch vs reference"

    print("KERNEL_OK")
</pallas_src>

<mosaic_0001>
module attributes {stable_mosaic.version = 11 : i64} {
  func.func @linear_kernel(%arg0: i32, %arg1: memref<2xf32, #tpu.memory_space<smem>>, %arg2: memref<16x128xf32, #tpu.memory_space<vmem>>, %arg3: memref<16x128xf32, #tpu.memory_space<vmem>>) attributes {dimension_semantics = [#tpu.dimension_semantics<parallel>], iteration_bounds = array<i64: 1>, scalar_prefetch = 1 : i64, scratch_operands = 0 : i64, tpu.core_type = #tpu.core_type<tc>, window_params = [{transform_indices = @transform_0, window_bounds = array<i64: 16, 128>}, {transform_indices = @transform_1, window_bounds = array<i64: 16, 128>}]} {
    %c0 = arith.constant 0 : index
    %0 = memref.load %arg1[%c0] : memref<2xf32, #tpu.memory_space<smem>>
    %c1 = arith.constant 1 : index
    %1 = memref.load %arg1[%c1] : memref<2xf32, #tpu.memory_space<smem>>
    %c0_0 = arith.constant 0 : index
    %c0_1 = arith.constant 0 : index
    %2 = vector.load %arg2[%c0_0, %c0_1] : memref<16x128xf32, #tpu.memory_space<vmem>>, vector<16x128xf32>
    %3 = vector.broadcast %0 : f32 to vector<16x128xf32>
    %4 = arith.mulf %2, %3 : vector<16x128xf32>
    %5 = vector.broadcast %1 : f32 to vector<16x128xf32>
    %6 = arith.addf %4, %5 : vector<16x128xf32>
    %c0_2 = arith.constant 0 : index
    %c0_3 = arith.constant 0 : index
    %7 = vector.load %arg3[%c0_2, %c0_3] : memref<16x128xf32, #tpu.memory_space<vmem>>, vector<16x128xf32>
    tpu.vector_store %arg3[%c0_2, %c0_3], %6 {strides = array<i32>} : memref<16x128xf32, #tpu.memory_space<vmem>>, vector<16x128xf32>,
    return
  }
  func.func @transform_0(%arg0: i32, %arg1: memref<2xf32, #tpu.memory_space<smem>>) -> (i32, i32) {
    %c0_i32 = arith.constant 0 : i32
    %c0_i32_0 = arith.constant 0 : i32
    return %arg0, %c0_i32 : i32, i32
  }
  func.func @transform_1(%arg0: i32, %arg1: memref<2xf32, #tpu.memory_space<smem>>) -> (i32, i32) {
    %c0_i32 = arith.constant 0 : i32
    %c0_i32_0 = arith.constant 0 : i32
    return %arg0, %c0_i32 : i32, i32
  }
}

</mosaic_0001>

<llo_original>
// kernel: tpu_custom_call.1
$region0: #{tpu_custom_call.1}
  #allocation0 [shape = 'u32[]', space=smem, size = 0x4, offset = 0x4, fixed_abs, tag = 'smem constant byte address 0x4 - core index']
  #allocation1 [shape = 'u32[144,128]{1,0:T(1,128)}', space=vmem, size = 0x12000, scoped, tag = 'internal scratch']
  #allocation2 [shape = 's32[1]{0}', space=sflag, size = 0x4, scoped, tag = 'scoped memory for tpu_custom_call.1']
  #allocation3 [shape = 'u8[512]{0}', space=smem, size = 0x200, scoped, tag = 'prefetched SMEM operand 0']
  %s0 = inlined_call_operand.hbm [shape: f32[2], index: 0, kind: input, shape index: {}]
  %s1 = inlined_call_operand.hbm [shape: f32[16,128], index: 1, kind: input, shape index: {}]
  %s2 = inlined_call_operand.hbm [shape: f32[16,128], index: 2, kind: output, shape index: {}]
  %s3 = sld [smem:[#allocation0]]
  $region18: #{tpu_custom_call.1} parent=0
    _
  %s5 = ssub.s32 1, %s3
  %s6 = scalar_select 0, %s5, %s3
  %8 = dma.hbm_to_smem %s0, 16, [#allocation3], [#allocation2]
  %9 = dma.done [#allocation2], 16
  %10 = sfence
  $region1: #{tpu_custom_call.1} parent=0
    #allocation4 [shape = 'u8[8192]{0}', space=vmem, size = 0x2000, scoped, tag = 'input window, operand 1, single buffered']
    #allocation5 [shape = 's32[1]{0}', space=sflag, size = 0x4, scoped, tag = 'scoped memory for tpu_custom_call.1']
    #allocation6 [shape = 's32[1]{0}', space=sflag, size = 0x4, scoped, tag = 'scoped memory for tpu_custom_call.1']
    #allocation7 [shape = 'u8[8192]{0}', space=vmem, size = 0x2000, scoped, tag = 'output window, operand 0, single buffered']
    %11 = vsyncpa [#allocation5], 0
    %12 = vsyncpa [#allocation6], 0
    // Predicated region
    $region2: #{tpu_custom_call.1} parent=1 // pred_check
      _
    $region3: #{tpu_custom_call.1} parent=1 // pred_check_branch
      %14 = sbr.rel (0) target = $region5
    $region4: #{tpu_custom_call.1} parent=1 // pred_region
      %s16 = ssub.s32 256, 256
      %17 = vsyncadd [#allocation5], %s16
      %s18 = sshll.u32 [#allocation4], 4
      %s19 = int_to_ptr.vmem [resolvable:$true] %s18
      %24 = dma.hbm_to_vmem [thread:$0]  %s1, 256, %s19, [#allocation5], 128, 128, 8
    $region5: #{tpu_custom_call.1} parent=1 // pred_fallthru
      _
    // Predicated region
    $region6: #{tpu_custom_call.1} parent=1 // pred_check
      _
    $region7: #{tpu_custom_call.1} parent=1 // pred_check_branch
      %26 = sbr.rel (0) target = $region9
    $region8: #{tpu_custom_call.1} parent=1 // pred_region
      %27 = dma.done [#allocation5], 256
    $region9: #{tpu_custom_call.1} parent=1 // pred_fallthru
      _
    %s28 = sld [smem:[#allocation3]]
    %s29 = sld [smem:[#allocation3 + $0x1]]
    %v30 = vld [vmem:[#allocation4] sm:$0xff]
    %v31 = vld [vmem:[#allocation4 + $0x8] sm:$0xff]
    %v32 = vstv %s28
    %v33 = vmul.f32 %v30, %v32
    %v34 = vmul.f32 %v31, %v32
    %v35 = vstv %s29
    %v36 = vadd.f32 %v33, %v35
    %v37 = vadd.f32 %v34, %v35
    %38 = vst [vmem:[#allocation7] sm:$0xff] %v36
    %39 = vst [vmem:[#allocation7 + $0x8] sm:$0xff] %v37
    // Predicated region
    $region10: #{tpu_custom_call.1} parent=1 // pred_check
      _
    $region11: #{tpu_custom_call.1} parent=1 // pred_check_branch
      %41 = sbr.rel (0) target = $region13
    $region12: #{tpu_custom_call.1} parent=1 // pred_region
      %s43 = ssub.s32 256, 256
      %44 = vsyncadd [#allocation6], %s43
      %s45 = sshll.u32 [#allocation7], 4
      %s46 = int_to_ptr.vmem [resolvable:$true] %s45
      %51 = dma.vmem_to_hbm [thread:$0]  %s46, 256, %s2, [#allocation6], 128, 128, 8
    $region13: #{tpu_custom_call.1} parent=1 // pred_fallthru
      _
    // Predicated region
    $region14: #{tpu_custom_call.1} parent=1 // pred_check
      _
    $region15: #{tpu_custom_call.1} parent=1 // pred_check_branch
      %53 = sbr.rel (0) target = $region17
    $region16: #{tpu_custom_call.1} parent=1 // pred_region
      %54 = dma.done [#allocation6], 256
    $region17: #{tpu_custom_call.1} parent=1 // pred_fallthru
      _
    %55 = vsyncpa [#allocation5], 1
    %56 = vsyncpa [#allocation6], 1

</llo_original>
